<compile_context>
chip_gen: v6e
topology: v6e:2x2x1
jax: 0.10.0
libtpu: 0.0.40
codegen_flags: <defaults>
</compile_context>

<pallas_src>
import numpy as np
import jax
import jax.numpy as jnp
from jax.experimental import pallas as pl
from jax.experimental.pallas import tpu as pltpu

EPS = 1e-6
NEG = -1e30  # column padding value for logits: exp(NEG - m) == 0 in f32


def _round_up(x, m):
    return ((x + m - 1) // m) * m


def cpa_loss_kernel(logits_ref, targets_ref, s_rows_ref, loss_ref):
    logits = logits_ref[...]            # (TB, Cp) f32
    tgt = targets_ref[...]              # (TB, 1)  i32
    s_rows = s_rows_ref[...]            # (TB, Cp) f32, s[tgt_b, :] with 1 at tgt col

    TB, Cp = logits.shape

    # numerically-stable exp (the only full-tile transcendental)
    m = jnp.max(logits, axis=-1, keepdims=True)                  # (TB, 1)
    e = jnp.exp(logits - m)                                      # (TB, Cp)

    # numerator at the target column: e[b, tgt_b]
    class_ids = jax.lax.broadcasted_iota(jnp.int32, (TB, Cp), 1)
    onehot = (class_ids == tgt).astype(jnp.float32)              # (TB, Cp)
    e_t = jnp.sum(onehot * e, axis=-1, keepdims=True)            # (TB, 1)

    # denominator at the target column (exact, see header derivation)
    denom_t = jnp.sum(e * s_rows, axis=-1, keepdims=True)        # (TB, 1)

    # per-sample loss: -log(sigma_t + eps), sigma_t = e_t / (denom_t + eps)
    sigma_t = e_t / (denom_t + EPS)                              # (TB, 1)
    loss_ref[...] = -jnp.log(sigma_t + EPS)                      # (TB, 1)


def make_s(class_counts, beta=0.8):
    """Deterministic parameter setup matching CPA_Loss_init.__init__."""
    counts = jnp.asarray(class_counts, dtype=jnp.float32)
    cond = counts[:, None] > counts[None, :]
    trues = (counts[None, :] / counts[:, None]) ** beta
    falses = jnp.ones((counts.shape[0], counts.shape[0]), jnp.float32)
    return jnp.where(cond, trues, falses)


def cpa_loss_init(logits, targets, s, *, block_b=512):
    """Pallas implementation of CPA_Loss_init.forward(logits, targets)."""
    B, C = logits.shape
    logits = logits.astype(jnp.float32)
    s = jnp.asarray(s, jnp.float32)
    targets = targets.astype(jnp.int32)

    # Gather the per-sample row of s and overwrite its target column with 1:
    #   denom_t[b] = sum_k s_rows[b, k] * exp(logits[b, k])   (exact).
    s_rows = jnp.take(s, targets, axis=0)                        # (B, C)
    s_rows = s_rows.at[jnp.arange(B), targets].set(1.0)

    # pad classes up to a multiple of 128 lanes (lane-dense vregs)
    cp = _round_up(C, 128)
    if cp != C:
        logits = jnp.pad(logits, ((0, 0), (0, cp - C)), constant_values=NEG)
        s_rows = jnp.pad(s_rows, ((0, 0), (0, cp - C)))

    # batch tile: multiple of 8 sublanes, sized so one (tb, cp) f32 tile ~<= 2 MiB
    tb_cap = max(8, ((2 * 1024 * 1024) // (cp * 4)) // 8 * 8)
    tb = min(block_b, tb_cap, _round_up(B, 8))
    tb = max(8, (tb // 8) * 8)
    b_pad = _round_up(B, tb)
    if b_pad != B:
        logits = jnp.pad(logits, ((0, b_pad - B), (0, 0)))
        s_rows = jnp.pad(s_rows, ((0, b_pad - B), (0, 0)))
        targets = jnp.pad(targets, (0, b_pad - B))
    targets2 = targets.reshape(b_pad, 1)
    n_tiles = b_pad // tb

    per_sample = pl.pallas_call(
        cpa_loss_kernel,
        out_shape=jax.ShapeDtypeStruct((b_pad, 1), jnp.float32),
        grid_spec=pltpu.PrefetchScalarGridSpec(
            num_scalar_prefetch=0,
            grid=(n_tiles,),
            in_specs=[
                pl.BlockSpec((tb, cp), lambda i: (i, 0)),   # logits tile
                pl.BlockSpec((tb, 1), lambda i: (i, 0)),    # targets tile
                pl.BlockSpec((tb, cp), lambda i: (i, 0)),   # gathered s rows tile
            ],
            out_specs=pl.BlockSpec((tb, 1), lambda i: (i, 0)),
        ),
        compiler_params=pltpu.CompilerParams(
            dimension_semantics=("parallel",),              # safe: disjoint out blocks
            vmem_limit_bytes=48 * 1024 * 1024,
        ),
    )(logits, targets2, s_rows)

    # drop batch padding, reduce and average over the true batch in plain JAX
    return jnp.sum(per_sample[:B, 0]) / B


def cpa_loss_ref(logits, targets, s):
    """Pure-JAX reference mirroring the PyTorch forward."""
    B, C = logits.shape
    t = jax.nn.one_hot(targets, C, dtype=jnp.float32)
    logits = logits - jnp.max(logits, axis=-1, keepdims=True)
    e = jnp.exp(logits)
    denom = ((1.0 - t)[:, None, :] * s[None, :, :] * e[:, None, :]).sum(-1) + e
    sigma = e / (denom + EPS)
    loss = (-t * jnp.log(sigma + EPS)).sum(-1)
    return loss.mean()


if __name__ == "__main__":
    # small deterministic example: 8 classes, batch of 50 (not a tile multiple,
    # so the class padding (8 -> 128), batch padding and multi-tile grid paths
    # are all exercised).
    class_counts = [100.0, 50.0, 30.0, 200.0, 10.0, 80.0, 60.0, 40.0]
    beta = 0.8
    C = len(class_counts)
    B = 50

    s = make_s(class_counts, beta)

    key = jax.random.PRNGKey(0)
    k1, k2 = jax.random.split(key)
    logits = jax.random.normal(k1, (B, C), dtype=jnp.float32) * 2.0
    targets = jax.random.randint(k2, (B,), 0, C, dtype=jnp.int32)

    ref = jax.block_until_ready(cpa_loss_ref(logits, targets, s))

    # multi-tile path (tb = 16 -> 4 grid steps)
    loss_small = jax.block_until_ready(
        cpa_loss_init(logits, targets, s, block_b=16))
    # default-tile path (single tile)
    loss_default = jax.block_until_ready(cpa_loss_init(logits, targets, s))

    np.testing.assert_allclose(np.asarray(loss_small), np.asarray(ref),
                               rtol=1e-5, atol=1e-5)
    np.testing.assert_allclose(np.asarray(loss_default), np.asarray(ref),
                               rtol=1e-5, atol=1e-5)
    print("KERNEL_OK")
</pallas_src>

<mosaic_0001>
module attributes {stable_mosaic.version = 11 : i64} {
  func.func @cpa_loss_kernel(%arg0: i32, %arg1: memref<16x128xf32, #tpu.memory_space<vmem>>, %arg2: memref<16x1xi32, #tpu.memory_space<vmem>>, %arg3: memref<16x128xf32, #tpu.memory_space<vmem>>, %arg4: memref<16x1xf32, #tpu.memory_space<vmem>>) attributes {dimension_semantics = [#tpu.dimension_semantics<parallel>], iteration_bounds = array<i64: 4>, scalar_prefetch = 0 : i64, scratch_operands = 0 : i64, tpu.core_type = #tpu.core_type<tc>, window_params = [{transform_indices = @transform_0, window_bounds = array<i64: 16, 128>}, {transform_indices = @transform_1, window_bounds = array<i64: 16, 1>}, {transform_indices = @transform_2, window_bounds = array<i64: 16, 128>}, {transform_indices = @transform_3, window_bounds = array<i64: 16, 1>}]} {
    %c0 = arith.constant 0 : index
    %c0_0 = arith.constant 0 : index
    %0 = vector.load %arg1[%c0, %c0_0] : memref<16x128xf32, #tpu.memory_space<vmem>>, vector<16x128xf32>
    %c0_1 = arith.constant 0 : index
    %c0_2 = arith.constant 0 : index
    %1 = vector.load %arg2[%c0_1, %c0_2] : memref<16x1xi32, #tpu.memory_space<vmem>>, vector<16x1xi32>
    %c0_3 = arith.constant 0 : index
    %c0_4 = arith.constant 0 : index
    %2 = vector.load %arg3[%c0_3, %c0_4] : memref<16x128xf32, #tpu.memory_space<vmem>>, vector<16x128xf32>
    %cst = arith.constant dense<0xFF800000> : vector<16xf32>
    %3 = vector.multi_reduction <maximumf>, %0, %cst [1] : vector<16x128xf32> to vector<16xf32>
    %4 = vector.shape_cast %3 : vector<16xf32> to vector<16x1xf32>
    %5 = vector.broadcast %4 : vector<16x1xf32> to vector<16x128xf32>
    %6 = arith.subf %0, %5 : vector<16x128xf32>
    %7 = math.exp %6 : vector<16x128xf32>
    %8 = tpu.iota {dimensions = array<i32: 1>} : vector<16x128xi32>
    %9 = vector.broadcast %1 : vector<16x1xi32> to vector<16x128xi32>
    %10 = arith.cmpi eq, %8, %9 : vector<16x128xi32>
    %11 = arith.extui %10 : vector<16x128xi1> to vector<16x128xi32>
    %12 = arith.sitofp %11 : vector<16x128xi32> to vector<16x128xf32>
    %13 = arith.mulf %12, %7 : vector<16x128xf32>
    %cst_5 = arith.constant dense<0.000000e+00> : vector<16xf32>
    %14 = vector.multi_reduction <add>, %13, %cst_5 [1] : vector<16x128xf32> to vector<16xf32>
    %15 = vector.shape_cast %14 : vector<16xf32> to vector<16x1xf32>
    %16 = arith.mulf %7, %2 : vector<16x128xf32>
    %cst_6 = arith.constant dense<0.000000e+00> : vector<16xf32>
    %17 = vector.multi_reduction <add>, %16, %cst_6 [1] : vector<16x128xf32> to vector<16xf32>
    %18 = vector.shape_cast %17 : vector<16xf32> to vector<16x1xf32>
    %cst_7 = arith.constant 9.99999997E-7 : f32
    %19 = vector.broadcast %cst_7 : f32 to vector<16x1xf32>
    %20 = arith.addf %18, %19 : vector<16x1xf32>
    %21 = arith.divf %15, %20 : vector<16x1xf32>
    %cst_8 = arith.constant 9.99999997E-7 : f32
    %22 = vector.broadcast %cst_8 : f32 to vector<16x1xf32>
    %23 = arith.addf %21, %22 : vector<16x1xf32>
    %24 = math.log %23 : vector<16x1xf32>
    %cst_9 = arith.constant 0.000000e+00 : f32
    %25 = vector.broadcast %cst_9 : f32 to vector<16x1xf32>
    %26 = arith.subf %25, %24 : vector<16x1xf32>
    %c0_10 = arith.constant 0 : index
    %c0_11 = arith.constant 0 : index
    %27 = vector.load %arg4[%c0_10, %c0_11] : memref<16x1xf32, #tpu.memory_space<vmem>>, vector<16x1xf32>
    tpu.vector_store %arg4[%c0_10, %c0_11], %26 {strides = array<i32>} : memref<16x1xf32, #tpu.memory_space<vmem>>, vector<16x1xf32>,
    return
  }
  func.func @transform_0(%arg0: i32) -> (i32, i32) {
    %c0_i32 = arith.constant 0 : i32
    %c0_i32_0 = arith.constant 0 : i32
    return %arg0, %c0_i32 : i32, i32
  }
  func.func @transform_1(%arg0: i32) -> (i32, i32) {
    %c0_i32 = arith.constant 0 : i32
    %c0_i32_0 = arith.constant 0 : i32
    return %arg0, %c0_i32 : i32, i32
  }
  func.func @transform_2(%arg0: i32) -> (i32, i32) {
    %c0_i32 = arith.constant 0 : i32
    %c0_i32_0 = arith.constant 0 : i32
    return %arg0, %c0_i32 : i32, i32
  }
  func.func @transform_3(%arg0: i32) -> (i32, i32) {
    %c0_i32 = arith.constant 0 : i32
    %c0_i32_0 = arith.constant 0 : i32
    return %arg0, %c0_i32 : i32, i32
  }
}

</mosaic_0001>

<llo_original>
// kernel: tpu_custom_call.1
$region0: #{tpu_custom_call.1}
  #allocation0 [shape = 'u32[]', space=smem, size = 0x4, offset = 0x4, fixed_abs, tag = 'smem constant byte address 0x4 - core index']
  #allocation1 [shape = 'u32[144,128]{1,0:T(1,128)}', space=vmem, size = 0x12000, scoped, tag = 'internal scratch']
  %s0 = inlined_call_operand.vmem [shape: f32[64,128], index: 0, kind: input, shape index: {}]
  %s1 = inlined_call_operand.vmem [shape: s32[64,1], index: 1, kind: input, shape index: {}]
  %s2 = inlined_call_operand.hbm [shape: f32[64,128], index: 2, kind: input, shape index: {}]
  %s3 = inlined_call_operand.vmem [shape: f32[64,1], index: 3, kind: output, shape index: {}]
  %s4 = sld [smem:[#allocation0]]
  $region49: #{tpu_custom_call.1} parent=0
    _
  %s6 = ssub.s32 1, %s4
  %s7 = scalar_select 0, %s6, %s4
  $region1: #{tpu_custom_call.1} parent=0
    #allocation2 [shape = 'u8[16384]{0}', space=vmem, size = 0x4000, scoped, tag = 'input window, operand 2']
    #allocation3 [shape = 's32[2]{0}', space=sflag, size = 0x8, scoped, tag = 'scoped memory for tpu_custom_call.1']
    %8 = vsyncpa [#allocation3], 0
    %s9 = scalar_lea.sflag [#allocation3], 1
    %10 = vsyncpa %s9, 0
    loop: start=0, step=1, limit=6
    $region2: #{tpu_custom_call.1} parent=1 // loop_pre_header
      _
    $region3: #{tpu_custom_call.1} parent=1 // loop_header
      %s12 = sphi 0, %s16
      %p13 = scmp.ge.s32.totalorder %s12, 6
      %s22 = sphi 0, %s24
      %s25 = sphi 0, %s22
      %s26 = sphi 0, %s25
      %s42 = sphi 0, %s26
      %s48 = sphi 0, %s50
      %s51 = sphi 0, %s48
      %s52 = sphi 0, %s51
      %s68 = sphi 0, %s52
      %s74 = sphi 0, %s76
      %s77 = sphi 0, %s74
      %s78 = sphi 0, %s77
      %s94 = sphi 0, %s78
      %s100 = sphi 0, %s102
      %s103 = sphi 0, %s100
      %s104 = sphi 0, %s103
      %s120 = sphi 0, %s104
    $region4: #{tpu_custom_call.1} parent=1 // loop_header_branch
      %15 = sbr.rel (%p13) target = $region8
    $region5: #{tpu_custom_call.1} parent=1 // loop_body
      %s17 = ssub.s32 %s12, 1
      %s18 = ssub.s32 %s12, 2
      %s19 = sadd.s32 %s12, 1
      %s20 = ssub.s32 %s12, %s19
      %p21 = scmp.eq.s32.totalorder %s20, 0
      %s23 = sadd.s32 %s22, 1
      %s24 = scalar_select %p21, %s22, %s23
      %p27 = pneg %p21
      %p28 = scmp.eq.s32.totalorder %s12, 3
      %p29 = por %p27, %p28
      %p30 = scmp.ne.s32.totalorder %s22, %s25
      %p31 = scmp.eq.s32.totalorder %s12, 0
      %p32 = por %p30, %p31
      %p33 = scmp.ne.s32.totalorder %s22, %s25
      %p34 = scmp.eq.s32.totalorder %s17, 3
      %p35 = por %p33, %p34
      %p36 = scmp.ne.s32.totalorder %s25, %s26
      %p37 = scmp.eq.s32.totalorder %s17, 0
      %p38 = por %p36, %p37
      %p39 = scmp.ne.s32.totalorder %s25, %s26
      %p40 = scmp.eq.s32.totalorder %s18, 3
      %p41 = por %p39, %p40
      %p43 = scmp.ne.s32.totalorder %s26, %s42
      %p44 = scmp.eq.s32.totalorder %s18, 0
      %p45 = por %p43, %p44
      %s46 = ssub.s32 %s12, %s19
      %p47 = scmp.eq.s32.totalorder %s46, 0
      %s49 = sadd.s32 %s48, 1
      %s50 = scalar_select %p47, %s48, %s49
      %p53 = pneg %p47
      %p54 = scmp.eq.s32.totalorder %s12, 3
      %p55 = por %p53, %p54
      %p56 = scmp.ne.s32.totalorder %s48, %s51
      %p57 = scmp.eq.s32.totalorder %s12, 0
      %p58 = por %p56, %p57
      %p59 = scmp.ne.s32.totalorder %s48, %s51
      %p60 = scmp.eq.s32.totalorder %s17, 3
      %p61 = por %p59, %p60
      %p62 = scmp.ne.s32.totalorder %s51, %s52
      %p63 = scmp.eq.s32.totalorder %s17, 0
      %p64 = por %p62, %p63
      %p65 = scmp.ne.s32.totalorder %s51, %s52
      %p66 = scmp.eq.s32.totalorder %s18, 3
      %p67 = por %p65, %p66
      %p69 = scmp.ne.s32.totalorder %s52, %s68
      %p70 = scmp.eq.s32.totalorder %s18, 0
      %p71 = por %p69, %p70
      %s72 = ssub.s32 %s12, %s19
      %p73 = scmp.eq.s32.totalorder %s72, 0
      %s75 = sadd.s32 %s74, 1
      %s76 = scalar_select %p73, %s74, %s75
      %p79 = pneg %p73
      %p80 = scmp.eq.s32.totalorder %s12, 3
      %p81 = por %p79, %p80
      %p82 = scmp.ne.s32.totalorder %s74, %s77
      %p83 = scmp.eq.s32.totalorder %s12, 0
      %p84 = por %p82, %p83
      %p85 = scmp.ne.s32.totalorder %s74, %s77
      %p86 = scmp.eq.s32.totalorder %s17, 3
      %p87 = por %p85, %p86
      %p88 = scmp.ne.s32.totalorder %s77, %s78
      %p89 = scmp.eq.s32.totalorder %s17, 0
      %p90 = por %p88, %p89
      %p91 = scmp.ne.s32.totalorder %s77, %s78
      %p92 = scmp.eq.s32.totalorder %s18, 3
      %p93 = por %p91, %p92
      %p95 = scmp.ne.s32.totalorder %s78, %s94
      %p96 = scmp.eq.s32.totalorder %s18, 0
      %p97 = por %p95, %p96
      %s98 = ssub.s32 %s12, %s19
      %p99 = scmp.eq.s32.totalorder %s98, 0
      %s101 = sadd.s32 %s100, 1
      %s102 = scalar_select %p99, %s100, %s101
      %p105 = pneg %p99
      %p106 = scmp.eq.s32.totalorder %s12, 3
      %p107 = por %p105, %p106
      %p108 = scmp.ne.s32.totalorder %s100, %s103
      %p109 = scmp.eq.s32.totalorder %s12, 0
      %p110 = por %p108, %p109
      %p111 = scmp.ne.s32.totalorder %s100, %s103
      %p112 = scmp.eq.s32.totalorder %s17, 3
      %p113 = por %p111, %p112
      %p114 = scmp.ne.s32.totalorder %s103, %s104
      %p115 = scmp.eq.s32.totalorder %s17, 0
      %p116 = por %p114, %p115
      %p117 = scmp.ne.s32.totalorder %s103, %s104
      %p118 = scmp.eq.s32.totalorder %s18, 3
      %p119 = por %p117, %p118
      %p121 = scmp.ne.s32.totalorder %s104, %s120
      %p122 = scmp.eq.s32.totalorder %s18, 0
      %p123 = por %p121, %p122
      %p124 = scmp.le.s32.totalorder 1, %s12
      %p125 = scmp.lt.s32.totalorder %s12, 5
      %p126 = pnand %p124, %p125
      %p127 = pneg %p126
      // Predicated region
      $region9: #{tpu_custom_call.1} parent=5 // pred_check
        _
      $region10: #{tpu_custom_call.1} parent=5 // pred_check_branch
        %129 = sbr.rel (%p126) target = $region12
      $region11: #{tpu_custom_call.1} parent=5 // pred_region
        %s130 = ssub.s32 %s12, 1
      $region12: #{tpu_custom_call.1} parent=5 // pred_fallthru
        _
      %p131 = scmp.lt.s32.totalorder %s12, 4
      // Predicated region
      $region13: #{tpu_custom_call.1} parent=5 // pred_check
        %p132 = pneg %p131
      $region14: #{tpu_custom_call.1} parent=5 // pred_check_branch
        %134 = sbr.rel (%p132) target = $region16
      $region15: #{tpu_custom_call.1} parent=5 // pred_region
        // Predicated region
        $region17: #{tpu_custom_call.1} parent=15 // pred_check
          %p135 = pneg %p32
        $region18: #{tpu_custom_call.1} parent=15 // pred_check_branch
          %137 = sbr.rel (%p135) target = $region20
        $region19: #{tpu_custom_call.1} parent=15 // pred_region
          %s138 = smul.u32 2, %s12
          %p139 = scmp.lt.s32.totalorder %s138, 7
          %s140 = scalar_select %p139, %s138, 7
          %s141 = smul.addr %s140, 8
          %s142 = scalar_lea.vmem %s0, %s141
          %s143 = smul.u32 2, %s12
        $region20: #{tpu_custom_call.1} parent=15 // pred_fallthru
          _
        // Predicated region
        $region21: #{tpu_custom_call.1} parent=15 // pred_check
          %p144 = pneg %p58
        $region22: #{tpu_custom_call.1} parent=15 // pred_check_branch
          %146 = sbr.rel (%p144) target = $region24
        $region23: #{tpu_custom_call.1} parent=15 // pred_region
          %s147 = smul.u32 2, %s12
          %p148 = scmp.lt.s32.totalorder %s147, 7
          %s149 = scalar_select %p148, %s147, 7
          %s150 = smul.addr %s149, 8
          %s151 = scalar_lea.vmem %s1, %s150
          %s152 = smul.u32 2, %s12
        $region24: #{tpu_custom_call.1} parent=15 // pred_fallthru
          _
        // Predicated region
        $region25: #{tpu_custom_call.1} parent=15 // pred_check
          %p153 = pneg %p84
        $region26: #{tpu_custom_call.1} parent=15 // pred_check_branch
          %155 = sbr.rel (%p153) target = $region28
        $region27: #{tpu_custom_call.1} parent=15 // pred_region
          %s156 = sand.u32 %s74, 1
          %s157 = scalar_lea.sflag [#allocation3], %s156
          %s158 = sand.u32 %s74, 1
          %s159 = smul.addr %s158, 16
          %s160 = scalar_lea.vmem [#allocation2], %s159
          %s161 = smul.u32 2, %s12
          %s163 = ssub.s32 256, 256
          %164 = vsyncadd %s157, %s163
          %s165 = smul.addr %s161, 128
          %s166 = scalar_lea.hbm %s2, %s165
          %s167 = sshll.u32 %s160, 4
          %s168 = int_to_ptr.vmem [resolvable:$true] %s167
          %173 = dma.hbm_to_vmem [thread:$0]  %s166, 256, %s168, %s157, 128, 128, 8
        $region28: #{tpu_custom_call.1} parent=15 // pred_fallthru
          _
      $region16: #{tpu_custom_call.1} parent=5 // pred_fallthru
        _
      %p174 = scmp.le.s32.totalorder 1, %s12
      %p175 = scmp.lt.s32.totalorder %s12, 5
      %p176 = pnand %p174, %p175
      %p177 = pneg %p176
      // Predicated region
      $region29: #{tpu_custom_call.1} parent=5 // pred_check
        _
      $region30: #{tpu_custom_call.1} parent=5 // pred_check_branch
        %179 = sbr.rel (%p176) target = $region32
      $region31: #{tpu_custom_call.1} parent=5 // pred_region
        %s180 = ssub.s32 %s12, 1
        %s181 = sand.u32 %s77, 1
        %s182 = scalar_lea.sflag [#allocation3], %s181
        %s183 = sand.u32 %s77, 1
        %s184 = smul.addr %s183, 16
        %s185 = scalar_lea.vmem [#allocation2], %s184
        // Predicated region
        $region33: #{tpu_custom_call.1} parent=31 // pred_check
          %p186 = pneg %p90
        $region34: #{tpu_custom_call.1} parent=31 // pred_check_branch
          %188 = sbr.rel (%p186) target = $region36
        $region35: #{tpu_custom_call.1} parent=31 // pred_region
          %189 = dma.done %s182, 256
        $region36: #{tpu_custom_call.1} parent=31 // pred_fallthru
          _
        %s190 = smul.u32 2, %s17
        %p191 = scmp.lt.s32.totalorder %s190, 7
        %s192 = scalar_select %p191, %s190, 7
        %s193 = smul.addr %s192, 8
        %s194 = scalar_lea.vmem %s0, %s193
        %p195 = pneg %p38
        %p196 = pneg %p35
        %s197 = smul.u32 2, %s17
        %p198 = scmp.lt.s32.totalorder %s197, 7
        %s199 = scalar_select %p198, %s197, 7
        %s200 = smul.addr %s199, 8
        %s201 = scalar_lea.vmem %s1, %s200
        %p202 = pneg %p64
        %p203 = pneg %p61
        %s204 = sand.u32 %s77, 1
        %s205 = scalar_lea.sflag [#allocation3], %s204
        %s206 = sand.u32 %s77, 1
        %s207 = smul.addr %s206, 16
        %s208 = scalar_lea.vmem [#allocation2], %s207
        %p209 = pneg %p90
        %p210 = pneg %p87
        %p211 = pneg %p116
        %p212 = pneg %p113
        %s213 = smul.u32 2, %s17
        %p214 = scmp.lt.s32.totalorder %s213, 7
        %s215 = scalar_select %p214, %s213, 7
        %s216 = smul.addr %s215, 8
        %s217 = scalar_lea.vmem %s3, %s216
        %s218 = smul.u32 2, %s17
        %p219 = scmp.lt.s32.totalorder %s218, 7
        %s220 = scalar_select %p219, %s218, 7
        %s221 = smul.addr %s220, 8
        %s222 = scalar_lea.vmem %s0, %s221
        %s223 = smul.u32 2, %s17
        %s224 = smul.u32 2, %s17
        %p225 = scmp.lt.s32.totalorder %s224, 7
        %s226 = scalar_select %p225, %s224, 7
        %s227 = smul.addr %s226, 8
        %s228 = scalar_lea.vmem %s1, %s227
        %s229 = smul.u32 2, %s17
        %s230 = smul.u32 2, %s17
        %s231 = smul.u32 2, %s17
        %p232 = scmp.lt.s32.totalorder %s231, 7
        %s233 = scalar_select %p232, %s231, 7
        %s234 = smul.addr %s233, 8
        %s235 = scalar_lea.vmem %s3, %s234
        %s236 = smul.u32 2, %s17
        %v237 = vld [vmem:[%s222] sm:$0xff]
        %v238 = vld [vmem:[%s222 + $0x8] sm:$0xff]
        %v239 = vld [vmem:[%s228] sm:$0xff]
        %v240 = vld [vmem:[%s228 + $0x8] sm:$0xff]
        %v241 = vld [vmem:[%s185] sm:$0xff]
        %v242 = vld [vmem:[%s185 + $0x8] sm:$0xff]
        %243 = vmax.xlane.f32.xlu0 %v237
        %v244 = vpop.xlane.xlu0 %243
        %245 = vmax.xlane.f32.xlu0 %v238
        %v246 = vpop.xlane.xlu0 %245
        %v247 = vsub.f32 %v237, %v244
        %v248 = vsub.f32 %v238, %v246
        %v249 = vmul.f32 %v247, 1.442695
        %v250 = vpow.pop %v249
        %v251 = vmul.f32 %v248, 1.442695
        %v252 = vpow.pop %v251
        %v253 = vlaneseq
        %v254 = vand.u32 %v253, 127
        %255 = vset.pattern.permute.xlu0 0
        %256 = vperm.xlu0 %255, %v239
        %v257 = vpop.permute.xlu0 %256
        %258 = vset.pattern.permute.xlu0 0
        %259 = vperm.xlu0 %258, %v240
        %v260 = vpop.permute.xlu0 %259
        %vm261 = vcmp.eq.s32.totalorder %v254, %v257
        %vm262 = vcmp.eq.s32.totalorder %v254, %v260
        %v263 = vsel %vm261, 1, 0
        %v264 = vsel %vm262, 1, 0
        %v265 = vcvt.s32.f32 %v263
        %v266 = vcvt.s32.f32 %v264
        %v267 = vmul.f32 %v265, %v250
        %v268 = vmul.f32 %v266, %v252
        %269 = vadd.xlane.f32.xlu0 %v267
        %v270 = vpop.xlane.xlu0 %269
        %271 = vadd.xlane.f32.xlu0 %v268
        %v272 = vpop.xlane.xlu0 %271
        %v273 = vmul.f32 %v250, %v241
        %v274 = vmul.f32 %v252, %v242
        %275 = vadd.xlane.f32.xlu0 %v273
        %v276 = vpop.xlane.xlu0 %275
        %277 = vadd.xlane.f32.xlu0 %v274
        %v278 = vpop.xlane.xlu0 %277
        %v279 = vadd.f32 %v276, 1e-06
        %v280 = vadd.f32 %v278, 1e-06
        %v281 = vrcp.pop %v279
        %v282 = vmul.f32 %v270, %v281
        %v283 = vrcp.pop %v280
        %v284 = vmul.f32 %v272, %v283
        %v285 = vadd.f32 %v282, 1e-06
        %v286 = vadd.f32 %v284, 1e-06
        %v287 = vlog2.pop %v285
        %v288 = vmul.f32 %v287, 0.6931472
        %v289 = vlog2.pop %v286
        %v290 = vmul.f32 %v289, 0.6931472
        %v291 = vsub.f32 0.0, %v288
        %v292 = vsub.f32 0.0, %v290
        %vm293 = vcmask 7168
        %294 = vst.msk [vmem:[%s235] sm:$0xff] %vm293, %v291
        %295 = vst.msk [vmem:[%s235 + $0x8] sm:$0xff] %vm293, %v292
        %s296 = smul.u32 2, %s17
        %p297 = scmp.lt.s32.totalorder %s296, 7
        %s298 = scalar_select %p297, %s296, 7
        %s299 = smul.addr %s298, 8
        %s300 = scalar_lea.vmem %s3, %s299
        // Predicated region
        $region37: #{tpu_custom_call.1} parent=31 // pred_check
          %p301 = pneg %p113
        $region38: #{tpu_custom_call.1} parent=31 // pred_check_branch
          %303 = sbr.rel (%p301) target = $region40
        $region39: #{tpu_custom_call.1} parent=31 // pred_region
          %s304 = smul.u32 2, %s17
        $region40: #{tpu_custom_call.1} parent=31 // pred_fallthru
          _
      $region32: #{tpu_custom_call.1} parent=5 // pred_fallthru
        _
      %p305 = scmp.le.s32.totalorder 2, %s12
      // Predicated region
      $region41: #{tpu_custom_call.1} parent=5 // pred_check
        %p306 = pneg %p305
      $region42: #{tpu_custom_call.1} parent=5 // pred_check_branch
        %308 = sbr.rel (%p306) target = $region44
      $region43: #{tpu_custom_call.1} parent=5 // pred_region
        %s309 = ssub.s32 %s12, 2
        // Predicated region
        $region45: #{tpu_custom_call.1} parent=43 // pred_check
          %p310 = pneg %p119
        $region46: #{tpu_custom_call.1} parent=43 // pred_check_branch
          %312 = sbr.rel (%p310) target = $region48
        $region47: #{tpu_custom_call.1} parent=43 // pred_region
          %s313 = smul.u32 2, %s18
          %p314 = scmp.lt.s32.totalorder %s313, 7
          %s315 = scalar_select %p314, %s313, 7
          %s316 = smul.addr %s315, 8
          %s317 = scalar_lea.vmem %s3, %s316
        $region48: #{tpu_custom_call.1} parent=43 // pred_fallthru
          _
      $region44: #{tpu_custom_call.1} parent=5 // pred_fallthru
        _
    $region6: #{tpu_custom_call.1} parent=1 // loop_footer
      %s16 = sadd.s32 1, %s12
    $region7: #{tpu_custom_call.1} parent=1 // loop_footer_branch
      %11 = sbr.rel target = $region3
    $region8: #{tpu_custom_call.1} parent=1 // loop_exit
      _
    %318 = vsyncpa [#allocation3], 1
    %s319 = scalar_lea.sflag [#allocation3], 1
    %320 = vsyncpa %s319, 1

</llo_original>
